<compile_context>
chip_gen: v7x
topology: tpu7x:2x2x1
jax: 0.10.0
libtpu: 0.0.40
codegen_flags: <defaults>
</compile_context>

<pallas_src>
import functools

import jax
import jax.numpy as jnp
from jax.experimental import pallas as pl
from jax.experimental.pallas import tpu as pltpu


VMEM_LIMIT_BYTES = 48 * 1024 * 1024   # safe on v5e/v6e (128 MiB) and v7x (64 MiB)
_RESIDENT_BUDGET = 36 * 1024 * 1024   # headroom under the scoped VMEM limit


# --------------------------------------------------------------- kernels ----

def _linear_resident_kernel(x_ref, w_ref, b_ref, o_ref):
    """Whole (K, N) weight resident in VMEM; one (bm, N) output tile per step."""
    acc = jnp.dot(x_ref[...], w_ref[...], preferred_element_type=jnp.float32)
    o_ref[...] = (acc + b_ref[...].astype(jnp.float32)).astype(o_ref.dtype)


def _linear_tiled_kernel_f32out(x_ref, w_ref, b_ref, o_ref):
    """(M, N, K) tiled matmul; f32 output block doubles as the accumulator."""
    k = pl.program_id(2)

    @pl.when(k == 0)
    def _():
        o_ref[...] = jnp.zeros_like(o_ref)

    o_ref[...] += jnp.dot(x_ref[...], w_ref[...],
                          preferred_element_type=jnp.float32)

    @pl.when(k == pl.num_programs(2) - 1)
    def _():
        o_ref[...] += b_ref[...].astype(o_ref.dtype)


def _linear_tiled_kernel_acc(x_ref, w_ref, b_ref, o_ref, acc_ref):
    """(M, N, K) tiled matmul with a separate f32 accumulator (narrow outputs)."""
    k = pl.program_id(2)

    @pl.when(k == 0)
    def _():
        acc_ref[...] = jnp.zeros_like(acc_ref)

    acc_ref[...] += jnp.dot(x_ref[...], w_ref[...],
                            preferred_element_type=jnp.float32)

    @pl.when(k == pl.num_programs(2) - 1)
    def _():
        o_ref[...] = (acc_ref[...] + b_ref[...].astype(jnp.float32)
                      ).astype(o_ref.dtype)


# --------------------------------------------------------------- helpers ----

def _tile_and_pad(dim, preferred, align):
    """Return (tile, padded_dim) such that tile evenly divides padded_dim and is
    either the full dim (when small) or a multiple of `align`."""
    if dim <= preferred:
        return dim, dim                      # full-dim block: always legal
    t = (preferred // align) * align
    while t >= align:
        if dim % t == 0:
            return t, dim                    # largest aligned divisor <= preferred
        t -= align
    t = (preferred // align) * align         # no aligned divisor: pad up
    padded = ((dim + t - 1) // t) * t
    return t, padded


def prepare_params(weight, bias, compute_dtype=jnp.bfloat16):
    """One-time param-load transform: PyTorch (outDim, inDim) -> (inDim, outDim)
    layout for a clean (M,K)x(K,N) MXU feed, plus optional cast of the weight to
    the MXU compute dtype (accumulation stays f32 in-kernel)."""
    w_t = jnp.asarray(weight).T
    if compute_dtype is not None:
        w_t = w_t.astype(compute_dtype)
    return w_t, jnp.asarray(bias)


# --------------------------------------------------------------- forward ----

@functools.partial(jax.jit,
                   static_argnames=("tm", "tn", "tk", "allow_weight_resident"))
def dist_net_forward(x, weight_t, bias, *, tm=512, tn=512, tk=1024,
                     allow_weight_resident=True):
    """Pallas equivalent of dist_net.forward: y = x @ W^T + b.

    x:        (B, inDim)       activations (dtype defines the output dtype)
    weight_t: (inDim, outDim)  pre-transposed weight (see prepare_params)
    bias:     (outDim,)
    """
    B, K = x.shape
    K_w, N = weight_t.shape
    assert K == K_w, (K, K_w)
    assert bias.shape == (N,)

    out_dtype = x.dtype
    compute_dtype = weight_t.dtype
    xc = x.astype(compute_dtype) if x.dtype != compute_dtype else x
    cbytes = jnp.dtype(compute_dtype).itemsize
    obytes = jnp.dtype(out_dtype).itemsize

    # Tile selection: largest aligned divisor <= preferred, else pad to tiles.
    bm, Bp = _tile_and_pad(B, tm, 8)
    bn, Np = _tile_and_pad(N, tn, 128)
    bk, Kp = _tile_and_pad(K, tk, 128)

    # Pad operands so every block evenly divides its (padded) dimension.
    if Bp != B:
        xc = jnp.pad(xc, ((0, Bp - B), (0, 0)))
    if Kp != K:
        xc = jnp.pad(xc, ((0, 0), (0, Kp - K)))
        weight_t = jnp.pad(weight_t, ((0, Kp - K), (0, 0)))
    if Np != N:
        weight_t = jnp.pad(weight_t, ((0, 0), (0, Np - N)))
        bias = jnp.pad(bias, (0, Np - N))
    bias2 = bias.reshape(1, Np).astype(jnp.float32)

    # Weight-resident fast path: keep the whole (K, N) weight in VMEM and
    # stream x over M only (weight read from HBM exactly once).
    resident_bytes = (Kp * Np * cbytes * 2      # weight (worst-case double buffer)
                      + bm * Kp * cbytes * 2    # x tiles (double-buffered)
                      + bm * Np * obytes * 2    # output tiles
                      + Np * 4 * 2)             # bias
    use_resident = allow_weight_resident and resident_bytes <= _RESIDENT_BUDGET

    if use_resident:
        gm = Bp // bm
        if gm == 1 and bm % 16 == 0:            # give v7x's 2nd TensorCore work
            bm //= 2
            gm = 2
        grid = (gm,)
        kernel = _linear_resident_kernel
        in_specs = [
            pl.BlockSpec((bm, Kp), lambda i: (i, 0)),   # x: stream over M
            pl.BlockSpec((Kp, Np), lambda i: (0, 0)),   # weight: resident
            pl.BlockSpec((1, Np), lambda i: (0, 0)),    # bias: resident
        ]
        out_specs = pl.BlockSpec((bm, Np), lambda i: (i, 0))
        scratch_shapes = []
        dim_sem = ("parallel",)
        weight_reads = 1
    else:
        gm, gn, gk = Bp // bm, Np // bn, Kp // bk
        if gm * gn == 1:                          # v7x: >=2 parallel blocks
            if bm % 16 == 0:
                bm //= 2
                gm = 2
            elif bn % 256 == 0:
                bn //= 2
                gn = 2
        grid = (gm, gn, gk)
        if out_dtype == jnp.float32:
            kernel = _linear_tiled_kernel_f32out  # accumulate straight into o_ref
            scratch_shapes = []
        else:
            kernel = _linear_tiled_kernel_acc
            scratch_shapes = [pltpu.VMEM((bm, bn), jnp.float32)]
        in_specs = [
            pl.BlockSpec((bm, bk), lambda i, j, k: (i, k)),   # x
            pl.BlockSpec((bk, bn), lambda i, j, k: (k, j)),   # weight (K, N)
            pl.BlockSpec((1, bn), lambda i, j, k: (0, j)),    # bias
        ]
        out_specs = pl.BlockSpec((bm, bn), lambda i, j, k: (i, j))
        dim_sem = ("parallel", "parallel", "arbitrary")
        weight_reads = gm

    cost = pl.CostEstimate(
        flops=2 * Bp * Kp * Np,
        transcendentals=0,
        bytes_accessed=(Bp * Kp * cbytes
                        + Kp * Np * cbytes * weight_reads
                        + Bp * Np * obytes
                        + Np * 4),
    )

    out = pl.pallas_call(
        kernel,
        out_shape=jax.ShapeDtypeStruct((Bp, Np), out_dtype),
        grid_spec=pltpu.PrefetchScalarGridSpec(
            num_scalar_prefetch=0,
            grid=grid,
            in_specs=in_specs,
            out_specs=out_specs,
            scratch_shapes=scratch_shapes,
        ),
        compiler_params=pltpu.CompilerParams(
            dimension_semantics=dim_sem,
            vmem_limit_bytes=VMEM_LIMIT_BYTES,
        ),
        cost_estimate=cost,
    )(xc, weight_t, bias2)

    if Bp != B or Np != N:
        out = out[:B, :N]
    return out


# ------------------------------------------------------------------ init ----

def init_dist_net_params(key, in_dim, out_dim):
    """Mirror dist_net.__init__: weight ~ Normal(1.0, 0.01) in (outDim, inDim)
    layout, bias ~ U(-1/sqrt(inDim), 1/sqrt(inDim)) (PyTorch Linear default)."""
    kw, kb = jax.random.split(key)
    weight = 1.0 + 0.01 * jax.random.normal(kw, (out_dim, in_dim), dtype=jnp.float32)
    bound = 1.0 / float(in_dim) ** 0.5
    bias = jax.random.uniform(kb, (out_dim,), dtype=jnp.float32,
                              minval=-bound, maxval=bound)
    return weight, bias


if __name__ == "__main__":
    key = jax.random.PRNGKey(0)
    k_x, k_p, k_x2, k_p2 = jax.random.split(key, 4)

    # --- small shape consistent with the module: dist_net(64, 128), batch=16 ---
    batch, in_dim, out_dim = 16, 64, 128
    x = jax.random.normal(k_x, (batch, in_dim), dtype=jnp.float32)
    weight, bias = init_dist_net_params(k_p, in_dim, out_dim)

    # Default path: bf16 MXU operands, f32 accumulation, weight-resident grid.
    w_t_bf16, b_prep = prepare_params(weight, bias, compute_dtype=jnp.bfloat16)
    out = dist_net_forward(x, w_t_bf16, b_prep)
    jax.block_until_ready(out)
    ref_bf16 = (x.astype(jnp.bfloat16).astype(jnp.float32)
                @ weight.astype(jnp.bfloat16).astype(jnp.float32).T) + bias
    assert out.shape == (batch, out_dim)
    assert out.dtype == x.dtype
    assert jnp.allclose(out, ref_bf16, atol=1e-1, rtol=1e-2)

    # f32-operand path (compute_dtype=None) — functional check of the same grid.
    w_t_f32, _ = prepare_params(weight, bias, compute_dtype=None)
    out_f32 = dist_net_forward(x, w_t_f32, b_prep)
    jax.block_until_ready(out_f32)
    ref_f32 = x @ weight.T + bias
    assert jnp.allclose(out_f32, ref_f32, atol=1e-2, rtol=1e-2)

    # --- force the tiled (M, N, K) path with real K accumulation: grid (2,2,2) ---
    B2, K2, N2 = 256, 512, 256
    x2 = jax.random.normal(k_x2, (B2, K2), dtype=jnp.float32)
    w2, b2 = init_dist_net_params(k_p2, K2, N2)
    w2_t, b2_prep = prepare_params(w2, b2, compute_dtype=jnp.bfloat16)
    out2 = dist_net_forward(x2, w2_t, b2_prep, tm=128, tn=128, tk=256,
                            allow_weight_resident=False)
    jax.block_until_ready(out2)
    ref2 = (x2.astype(jnp.bfloat16).astype(jnp.float32)
            @ w2.astype(jnp.bfloat16).astype(jnp.float32).T) + b2
    assert out2.shape == (B2, N2)
    assert jnp.allclose(out2, ref2, atol=5e-1, rtol=2e-2)

    print("KERNEL_OK")
</pallas_src>

<mosaic_0001>
module attributes {stable_mosaic.version = 11 : i64} {
  func.func @_linear_resident_kernel(%arg0: i32, %arg1: memref<8x64xbf16, #tpu.memory_space<vmem>>, %arg2: memref<64x128xbf16, #tpu.memory_space<vmem>>, %arg3: memref<1x128xf32, #tpu.memory_space<vmem>>, %arg4: memref<8x128xf32, #tpu.memory_space<vmem>>) attributes {dimension_semantics = [#tpu.dimension_semantics<parallel>], iteration_bounds = array<i64: 2>, scalar_prefetch = 0 : i64, scratch_operands = 0 : i64, tpu.core_type = #tpu.core_type<tc>, window_params = [{transform_indices = @transform_0, window_bounds = array<i64: 8, 64>}, {pipeline_mode = #tpu.pipeline_mode<synchronous>, transform_indices = @transform_1, window_bounds = array<i64: 64, 128>}, {pipeline_mode = #tpu.pipeline_mode<synchronous>, transform_indices = @transform_2, window_bounds = array<i64: 1, 128>}, {transform_indices = @transform_3, window_bounds = array<i64: 8, 128>}]} {
    %c0 = arith.constant 0 : index
    %c0_0 = arith.constant 0 : index
    %0 = vector.load %arg1[%c0, %c0_0] : memref<8x64xbf16, #tpu.memory_space<vmem>>, vector<8x64xbf16>
    %c0_1 = arith.constant 0 : index
    %c0_2 = arith.constant 0 : index
    %1 = vector.load %arg2[%c0_1, %c0_2] : memref<64x128xbf16, #tpu.memory_space<vmem>>, vector<64x128xbf16>
    %cst = arith.constant dense<0.000000e+00> : vector<8x128xf32>
    %2 = tpu.matmul %0, %1, %cst {dimension_numbers = #tpu.dot_dimension_numbers<[1], [0], [0], [1], [0, 0, 1, 1], [], []>} : vector<8x64xbf16>, vector<64x128xbf16>, vector<8x128xf32> -> vector<8x128xf32>
    %c0_3 = arith.constant 0 : index
    %c0_4 = arith.constant 0 : index
    %3 = vector.load %arg3[%c0_3, %c0_4] : memref<1x128xf32, #tpu.memory_space<vmem>>, vector<1x128xf32>
    %4 = vector.broadcast %3 : vector<1x128xf32> to vector<8x128xf32>
    %5 = arith.addf %2, %4 : vector<8x128xf32>
    %c0_5 = arith.constant 0 : index
    %c0_6 = arith.constant 0 : index
    %6 = vector.load %arg4[%c0_5, %c0_6] : memref<8x128xf32, #tpu.memory_space<vmem>>, vector<8x128xf32>
    tpu.vector_store %arg4[%c0_5, %c0_6], %5 {strides = array<i32>} : memref<8x128xf32, #tpu.memory_space<vmem>>, vector<8x128xf32>,
    return
  }
  func.func @transform_0(%arg0: i32) -> (i32, i32) {
    %c0_i32 = arith.constant 0 : i32
    %c0_i32_0 = arith.constant 0 : i32
    return %arg0, %c0_i32 : i32, i32
  }
  func.func @transform_1(%arg0: i32) -> (i32, i32) {
    %c0_i32 = arith.constant 0 : i32
    %c0_i32_0 = arith.constant 0 : i32
    %c0_i32_1 = arith.constant 0 : i32
    return %c0_i32, %c0_i32_0 : i32, i32
  }
  func.func @transform_2(%arg0: i32) -> (i32, i32) {
    %c0_i32 = arith.constant 0 : i32
    %c0_i32_0 = arith.constant 0 : i32
    %c0_i32_1 = arith.constant 0 : i32
    return %c0_i32, %c0_i32_0 : i32, i32
  }
  func.func @transform_3(%arg0: i32) -> (i32, i32) {
    %c0_i32 = arith.constant 0 : i32
    %c0_i32_0 = arith.constant 0 : i32
    return %arg0, %c0_i32 : i32, i32
  }
}

</mosaic_0001>

<llo_original>
// kernel: dist_net_forward.1
$region0: #{dist_net_forward.1}
  #allocation0 [shape = 'u32[]', space=smem, size = 0x4, offset = 0x4, fixed_abs, tag = 'smem constant byte address 0x4 - core index']
  #allocation1 [shape = 'u32[144,128]{1,0:T(1,128)}', space=vmem, size = 0x12000, scoped, tag = 'internal scratch']
  %s0 = inlined_call_operand.vmem [shape: bf16[16,64], index: 0, kind: input, shape index: {}]
  %s1 = inlined_call_operand.hbm [shape: bf16[64,128], index: 1, kind: input, shape index: {}]
  %s2 = inlined_call_operand.vmem [shape: f32[1,128], index: 2, kind: input, shape index: {}]
  %s3 = inlined_call_operand.hbm [shape: f32[16,128], index: 3, kind: output, shape index: {}]
  %s4 = sld [smem:[#allocation0]]
  $region49: #{dist_net_forward.1} parent=0
    _
  %s6 = ssub.s32 1, %s4
  %s7 = scalar_select 0, %s6, %s4
  $region1: #{dist_net_forward.1} parent=0
    #allocation2 [shape = 'u8[16384]{0}', space=vmem, size = 0x4000, scoped, tag = 'input window, operand 1, single buffered']
    #allocation3 [shape = 's32[2]{0}', space=sflag, size = 0x8, scoped, tag = 'scoped memory for dist_net_forward.1']
    #allocation4 [shape = 's32[2]{0}', space=sflag, size = 0x8, scoped, tag = 'scoped memory for dist_net_forward.1']
    #allocation5 [shape = 'u8[8192]{0}', space=vmem, size = 0x2000, scoped, tag = 'output window, operand 0']
    %8 = vsyncpa [#allocation3], 0
    %9 = vsyncpa [#allocation4], 0
    %s10 = scalar_lea.sflag [#allocation4], 1
    %11 = vsyncpa %s10, 0
    loop: start=0, step=1, limit=4
    $region2: #{dist_net_forward.1} parent=1 // loop_pre_header
      _
    $region3: #{dist_net_forward.1} parent=1 // loop_header
      %s13 = sphi 0, %s17
      %p14 = scmp.ge.s32.totalorder %s13, 4
      %s23 = sphi 0, %s25
      %s26 = sphi 0, %s23
      %s27 = sphi 0, %s26
      %s43 = sphi 0, %s27
      %s47 = sphi 0, %s47
      %s49 = sphi 0, %s47
      %s50 = sphi 0, %s49
      %s64 = sphi 0, %s50
      %s68 = sphi 0, %s68
      %s70 = sphi 0, %s68
      %s71 = sphi 0, %s70
      %s85 = sphi 0, %s71
      %s91 = sphi 0, %s93
      %s94 = sphi 0, %s91
      %s95 = sphi 0, %s94
      %s111 = sphi 0, %s95
    $region4: #{dist_net_forward.1} parent=1 // loop_header_branch
      %16 = sbr.rel (%p14) target = $region8
    $region5: #{dist_net_forward.1} parent=1 // loop_body
      %s18 = ssub.s32 %s13, 1
      %s19 = ssub.s32 %s13, 2
      %s20 = sadd.s32 %s13, 1
      %s21 = ssub.s32 %s13, %s20
      %p22 = scmp.eq.s32.totalorder %s21, 0
      %s24 = sadd.s32 %s23, 1
      %s25 = scalar_select %p22, %s23, %s24
      %p28 = pneg %p22
      %p29 = scmp.eq.s32.totalorder %s13, 1
      %p30 = por %p28, %p29
      %p31 = scmp.ne.s32.totalorder %s23, %s26
      %p32 = scmp.eq.s32.totalorder %s13, 0
      %p33 = por %p31, %p32
      %p34 = scmp.ne.s32.totalorder %s23, %s26
      %p35 = scmp.eq.s32.totalorder %s18, 1
      %p36 = por %p34, %p35
      %p37 = scmp.ne.s32.totalorder %s26, %s27
      %p38 = scmp.eq.s32.totalorder %s18, 0
      %p39 = por %p37, %p38
      %p40 = scmp.ne.s32.totalorder %s26, %s27
      %p41 = scmp.eq.s32.totalorder %s19, 1
      %p42 = por %p40, %p41
      %p44 = scmp.ne.s32.totalorder %s27, %s43
      %p45 = scmp.eq.s32.totalorder %s19, 0
      %p46 = por %p44, %p45
      %s48 = sadd.s32 %s47, 1
      %p51 = scmp.eq.s32.totalorder %s13, 1
      %p52 = scmp.ne.s32.totalorder %s47, %s49
      %p53 = scmp.eq.s32.totalorder %s13, 0
      %p54 = por %p52, %p53
      %p55 = scmp.ne.s32.totalorder %s47, %s49
      %p56 = scmp.eq.s32.totalorder %s18, 1
      %p57 = por %p55, %p56
      %p58 = scmp.ne.s32.totalorder %s49, %s50
      %p59 = scmp.eq.s32.totalorder %s18, 0
      %p60 = por %p58, %p59
      %p61 = scmp.ne.s32.totalorder %s49, %s50
      %p62 = scmp.eq.s32.totalorder %s19, 1
      %p63 = por %p61, %p62
      %p65 = scmp.ne.s32.totalorder %s50, %s64
      %p66 = scmp.eq.s32.totalorder %s19, 0
      %p67 = por %p65, %p66
      %s69 = sadd.s32 %s68, 1
      %p72 = scmp.eq.s32.totalorder %s13, 1
      %p73 = scmp.ne.s32.totalorder %s68, %s70
      %p74 = scmp.eq.s32.totalorder %s13, 0
      %p75 = por %p73, %p74
      %p76 = scmp.ne.s32.totalorder %s68, %s70
      %p77 = scmp.eq.s32.totalorder %s18, 1
      %p78 = por %p76, %p77
      %p79 = scmp.ne.s32.totalorder %s70, %s71
      %p80 = scmp.eq.s32.totalorder %s18, 0
      %p81 = por %p79, %p80
      %p82 = scmp.ne.s32.totalorder %s70, %s71
      %p83 = scmp.eq.s32.totalorder %s19, 1
      %p84 = por %p82, %p83
      %p86 = scmp.ne.s32.totalorder %s71, %s85
      %p87 = scmp.eq.s32.totalorder %s19, 0
      %p88 = por %p86, %p87
      %s89 = ssub.s32 %s13, %s20
      %p90 = scmp.eq.s32.totalorder %s89, 0
      %s92 = sadd.s32 %s91, 1
      %s93 = scalar_select %p90, %s91, %s92
      %p96 = pneg %p90
      %p97 = scmp.eq.s32.totalorder %s13, 1
      %p98 = por %p96, %p97
      %p99 = scmp.ne.s32.totalorder %s91, %s94
      %p100 = scmp.eq.s32.totalorder %s13, 0
      %p101 = por %p99, %p100
      %p102 = scmp.ne.s32.totalorder %s91, %s94
      %p103 = scmp.eq.s32.totalorder %s18, 1
      %p104 = por %p102, %p103
      %p105 = scmp.ne.s32.totalorder %s94, %s95
      %p106 = scmp.eq.s32.totalorder %s18, 0
      %p107 = por %p105, %p106
      %p108 = scmp.ne.s32.totalorder %s94, %s95
      %p109 = scmp.eq.s32.totalorder %s19, 1
      %p110 = por %p108, %p109
      %p112 = scmp.ne.s32.totalorder %s95, %s111
      %p113 = scmp.eq.s32.totalorder %s19, 0
      %p114 = por %p112, %p113
      %p115 = scmp.le.s32.totalorder 1, %s13
      %p116 = scmp.lt.s32.totalorder %s13, 3
      %p117 = pnand %p115, %p116
      %p118 = pneg %p117
      // Predicated region
      $region9: #{dist_net_forward.1} parent=5 // pred_check
        _
      $region10: #{dist_net_forward.1} parent=5 // pred_check_branch
        %120 = sbr.rel (%p117) target = $region12
      $region11: #{dist_net_forward.1} parent=5 // pred_region
        %s121 = ssub.s32 %s13, 1
        // Predicated region
        $region13: #{dist_net_forward.1} parent=11 // pred_check
          %p122 = pneg %p60
        $region14: #{dist_net_forward.1} parent=11 // pred_check_branch
          %124 = sbr.rel (%p122) target = $region16
        $region15: #{dist_net_forward.1} parent=11 // pred_region
          %s126 = ssub.s32 512, 512
          %127 = vsyncadd [#allocation3], %s126
          %s128 = sshll.u32 [#allocation2], 4
          %s129 = int_to_ptr.vmem [resolvable:$true] %s128
          %134 = dma.hbm_to_vmem [thread:$0]  %s1, 512, %s129, [#allocation3], 64, 64, 4
        $region16: #{dist_net_forward.1} parent=11 // pred_fallthru
          _
        // Predicated region
        $region17: #{dist_net_forward.1} parent=11 // pred_check
          %p135 = pneg %p81
        $region18: #{dist_net_forward.1} parent=11 // pred_check_branch
          %137 = sbr.rel (%p135) target = $region20
        $region19: #{dist_net_forward.1} parent=11 // pred_region
          _
        $region20: #{dist_net_forward.1} parent=11 // pred_fallthru
          _
      $region12: #{dist_net_forward.1} parent=5 // pred_fallthru
        _
      %p138 = scmp.lt.s32.totalorder %s13, 2
      // Predicated region
      $region21: #{dist_net_forward.1} parent=5 // pred_check
        %p139 = pneg %p138
      $region22: #{dist_net_forward.1} parent=5 // pred_check_branch
        %141 = sbr.rel (%p139) target = $region24
      $region23: #{dist_net_forward.1} parent=5 // pred_region
        // Predicated region
        $region25: #{dist_net_forward.1} parent=23 // pred_check
          %p142 = pneg %p33
        $region26: #{dist_net_forward.1} parent=23 // pred_check_branch
          %144 = sbr.rel (%p142) target = $region28
        $region27: #{dist_net_forward.1} parent=23 // pred_region
          %p145 = scmp.lt.s32.totalorder %s13, 1
          %s146 = scalar_select %p145, %s13, 1
          %s147 = smul.addr %s146, 4
          %s148 = scalar_lea.vmem %s0, %s147
        $region28: #{dist_net_forward.1} parent=23 // pred_fallthru
          _
      $region24: #{dist_net_forward.1} parent=5 // pred_fallthru
        _
      %p149 = scmp.le.s32.totalorder 1, %s13
      %p150 = scmp.lt.s32.totalorder %s13, 3
      %p151 = pnand %p149, %p150
      %p152 = pneg %p151
      // Predicated region
      $region29: #{dist_net_forward.1} parent=5 // pred_check
        _
      $region30: #{dist_net_forward.1} parent=5 // pred_check_branch
        %154 = sbr.rel (%p151) target = $region32
      $region31: #{dist_net_forward.1} parent=5 // pred_region
        %s155 = ssub.s32 %s13, 1
        // Predicated region
        $region33: #{dist_net_forward.1} parent=31 // pred_check
          %p156 = pneg %p60
        $region34: #{dist_net_forward.1} parent=31 // pred_check_branch
          %158 = sbr.rel (%p156) target = $region36
        $region35: #{dist_net_forward.1} parent=31 // pred_region
          %159 = dma.done [#allocation3], 512
        $region36: #{dist_net_forward.1} parent=31 // pred_fallthru
          _
        %p160 = scmp.lt.s32.totalorder %s18, 1
        %s161 = scalar_select %p160, %s18, 1
        %s162 = smul.addr %s161, 4
        %s163 = scalar_lea.vmem %s0, %s162
        %p164 = pneg %p39
        %p165 = pneg %p36
        %p166 = pneg %p60
        %p167 = pneg %p57
        %p168 = pneg %p81
        %p169 = pneg %p78
        %p170 = pneg %p107
        %p171 = pneg %p104
        %s172 = sand.u32 %s94, 1
        %s173 = scalar_lea.sflag [#allocation4], %s172
        %s174 = sand.u32 %s94, 1
        %s175 = smul.addr %s174, 8
        %s176 = scalar_lea.vmem [#allocation5], %s175
        %p177 = scmp.lt.s32.totalorder %s18, 1
        %s178 = scalar_select %p177, %s18, 1
        %s179 = smul.addr %s178, 4
        %s180 = scalar_lea.vmem %s0, %s179
        %v182 = vld [vmem:[%s180] sm:$0xf]
        %v183 = vld [vmem:[#allocation2] sm:$0xf]
        %v184 = vld [vmem:[#allocation2 + $0x4] sm:$0xf]
        %v185 = vld [vmem:[#allocation2 + $0x8] sm:$0xf]
        %v186 = vld [vmem:[#allocation2 + $0xc] sm:$0xf]
        %v187 = vld [vmem:[#allocation2 + $0x10] sm:$0xf]
        %v188 = vld [vmem:[#allocation2 + $0x14] sm:$0xf]
        %v189 = vld [vmem:[#allocation2 + $0x18] sm:$0xf]
        %v190 = vld [vmem:[#allocation2 + $0x1c] sm:$0xf]
        %v191 = vld [vmem:[%s2] sm:$0x1]
        %v193 = vlaneseq
        %v194 = vshrl.u32 %v193, 7
        %v195 = vsub.s32 0, %v194
        %v196 = vrot.slane %v191, %v195
        %v206 = vunpack.c.l.b16 %v183
        %v207 = vunpack.c.l.b16 %v184
        %v208 = vunpack.c.l.b16 %v185
        %v209 = vunpack.c.l.b16 %v186
        %v210 = vunpack.c.l.b16 %v187
        %v211 = vunpack.c.l.b16 %v188
        %v212 = vunpack.c.l.b16 %v189
        %v213 = vunpack.c.l.b16 %v190
        %v214 = vpack.c.b16 %v207, %v206
        %v215 = vpack.c.b16 %v209, %v208
        %v216 = vpack.c.b16 %v211, %v210
        %v217 = vpack.c.b16 %v213, %v212
        %vm222 = vcmask 523264
        %v224 = vsel %vm222, %v182, 0
        %226 = vmatprep.subr.bf16.mxu0 0
        %227 = vmatpush1.bf16.msra.mxu0 %v214
        %228 = vmatprep.subr.bf16.mxu0 0
        %229 = vmatpush1.bf16.msra.mxu0 %v215
        %230 = vmatprep.subr.bf16.mxu0 0
        %231 = vmatpush1.bf16.msra.mxu0 %v216
        %232 = vmatprep.subr.bf16.mxu0 0
        %233 = vmatpush1.bf16.msra.mxu0 %v217
        %234 = vmatprep.subr.bf16.mxu0 0
        %235 = vmatpush1.bf16.msra.mxu0 0
        %236 = vmatprep.subr.bf16.mxu0 0
        %237 = vmatpush1.bf16.msra.mxu0 0
        %238 = vmatprep.subr.bf16.mxu0 0
        %239 = vmatpush1.bf16.msra.mxu0 0
        %240 = vmatprep.subr.bf16.mxu0 0
        %241 = vmatpush1.bf16.msra.mxu0 0
        %242 = vmatprep.subr.bf16.mxu0 0
        %243 = vmatpush1.bf16.msra.mxu0 0
        %244 = vmatprep.subr.bf16.mxu0 0
        %245 = vmatpush1.bf16.msra.mxu0 0
        %246 = vmatprep.subr.bf16.mxu0 0
        %247 = vmatpush1.bf16.msra.mxu0 0
        %248 = vmatprep.subr.bf16.mxu0 0
        %249 = vmatpush1.bf16.msra.mxu0 0
        %250 = vmatprep.subr.bf16.mxu0 0
        %251 = vmatpush1.bf16.msra.mxu0 0
        %252 = vmatprep.subr.bf16.mxu0 0
        %253 = vmatpush1.bf16.msra.mxu0 0
        %254 = vmatprep.subr.bf16.mxu0 0
        %255 = vmatpush1.bf16.msra.mxu0 0
        %256 = vmatprep.subr.bf16.mxu0 0
        %257 = vmatpush1.bf16.msra.mxu0 0
        %258 = vmatprep.mubr.bf16.mxu0 0
        %259 = vmatmul.mubr.bf16.gmra.mrb[0].mxu0 %v224
        %v260 = vpop.f32.mrb[0].mxu0
        %v261 = vadd.f32 %v196, %v260
        %v262 = vpop.f32.mrb[0].mxu0
        %v263 = vpop.f32.mrb[0].mxu0
        %v264 = vpop.f32.mrb[0].mxu0
        %265 = vdwg.mxu0
        %266 = vst [vmem:[%s176] sm:$0xff] %v261
        %s267 = sand.u32 %s94, 1
        %s268 = scalar_lea.sflag [#allocation4], %s267
        %s269 = sand.u32 %s94, 1
        %s270 = smul.addr %s269, 8
        %s271 = scalar_lea.vmem [#allocation5], %s270
        // Predicated region
        $region37: #{dist_net_forward.1} parent=31 // pred_check
          %p272 = pneg %p104
        $region38: #{dist_net_forward.1} parent=31 // pred_check_branch
          %274 = sbr.rel (%p272) target = $region40
        $region39: #{dist_net_forward.1} parent=31 // pred_region
          %s276 = ssub.s32 128, 128
          %277 = vsyncadd %s268, %s276
          %s278 = smul.addr %s18, 128
          %s279 = scalar_lea.hbm %s3, %s278
          %s281 = sshll.u32 %s271, 4
          %s282 = int_to_ptr.vmem [resolvable:$true] %s281
          %284 = dma.vmem_to_hbm [thread:$0]  %s282, 128, %s279, %s268
        $region40: #{dist_net_forward.1} parent=31 // pred_fallthru
          _
      $region32: #{dist_net_forward.1} parent=5 // pred_fallthru
        _
      %p285 = scmp.le.s32.totalorder 2, %s13
      // Predicated region
      $region41: #{dist_net_forward.1} parent=5 // pred_check
        %p286 = pneg %p285
      $region42: #{dist_net_forward.1} parent=5 // pred_check_branch
        %288 = sbr.rel (%p286) target = $region44
      $region43: #{dist_net_forward.1} parent=5 // pred_region
        %s289 = ssub.s32 %s13, 2
        // Predicated region
        $region45: #{dist_net_forward.1} parent=43 // pred_check
          %p290 = pneg %p110
        $region46: #{dist_net_forward.1} parent=43 // pred_check_branch
          %292 = sbr.rel (%p290) target = $region48
        $region47: #{dist_net_forward.1} parent=43 // pred_region
          %s293 = sand.u32 %s95, 1
          %s294 = scalar_lea.sflag [#allocation4], %s293
          %s295 = sand.u32 %s95, 1
          %s296 = smul.addr %s295, 8
          %s297 = scalar_lea.vmem [#allocation5], %s296
          %298 = dma.done %s294, 128
        $region48: #{dist_net_forward.1} parent=43 // pred_fallthru
          _
      $region44: #{dist_net_forward.1} parent=5 // pred_fallthru
        _
    $region6: #{dist_net_forward.1} parent=1 // loop_footer
      %s17 = sadd.s32 1, %s13
    $region7: #{dist_net_forward.1} parent=1 // loop_footer_branch
      %12 = sbr.rel target = $region3
    $region8: #{dist_net_forward.1} parent=1 // loop_exit
      _
    %299 = vsyncpa [#allocation3], 1
    %s300 = scalar_lea.sflag [#allocation3], 1
    %301 = vsyncpa %s300, 1
    %302 = vsyncpa [#allocation4], 1
    %s303 = scalar_lea.sflag [#allocation4], 1
    %304 = vsyncpa %s303, 1

</llo_original>
